<compile_context>
chip_gen: v7x
topology: tpu7x:2x2x1
jax: 0.10.0
libtpu: 0.0.40
codegen_flags: <defaults>
</compile_context>

<pallas_src>
import functools
import math

import jax
import jax.numpy as jnp
from jax.experimental import pallas as pl
from jax.experimental.pallas import tpu as pltpu


def _round_up(x, m):
    return (x + m - 1) // m * m


def _relora_kernel(x_ref, t_ref, wT_ref, aT_ref, bias_ref, o_ref, acc_ref, *, scale):
    # x_ref:    (tm, tk)     input tile (compute_dtype)
    # t_ref:    (tm, r_pad)  hoisted down-projection x @ B^T (f32)
    # wT_ref:   (tk, tn)     W^T tile (compute_dtype, contraction on sublanes)
    # aT_ref:   (r_pad, tn)  lora_A^T tile (f32)
    # bias_ref: (1, tn)      f32
    # o_ref:    (tm, tn)
    # acc_ref:  (tm, tn)     f32 scratch (base-path accumulator over K)
    k = pl.program_id(2)

    @pl.when(k == 0)
    def _():
        acc_ref[...] = jnp.zeros_like(acc_ref)

    # Inner loop: pure MXU accumulate of the base path x @ W^T.
    acc_ref[...] += jnp.dot(x_ref[...], wT_ref[...],
                            preferred_element_type=jnp.float32)

    # Epilogue on the last K step: rank-r LoRA correction, bias, scale, cast, store.
    @pl.when(k == pl.num_programs(2) - 1)
    def _():
        lora = jnp.dot(t_ref[...], aT_ref[...],
                       preferred_element_type=jnp.float32)
        out = acc_ref[...] + bias_ref[...] - scale * lora
        o_ref[...] = out.astype(o_ref.dtype)


def prepare_relora_params(weight, lora_A, lora_B, bias=None, *,
                          tn=512, tk=1024, compute_dtype=jnp.bfloat16):
    """One-time preprocessing of the (fixed) weights: transpose, pad, cast.

    Call once per weight update; reuse the returned dict across forwards.
    """
    out_features, in_features = weight.shape
    r = lora_A.shape[1]
    assert lora_A.shape == (out_features, r)
    assert lora_B.shape == (r, in_features)

    tn = min(tn, _round_up(out_features, 128))
    tk = min(tk, _round_up(in_features, 128))
    N_pad = _round_up(out_features, tn)
    K_pad = _round_up(in_features, tk)
    r_pad = _round_up(r, 8)

    # Base weight: pre-transposed, zero-padded, streamed in compute_dtype.
    wT = jnp.pad(weight.T, ((0, K_pad - in_features),
                            (0, N_pad - out_features))).astype(compute_dtype)
    # LoRA up-projection kept in f32 (rank-r traffic is negligible; avoids an
    # in-kernel cast on the epilogue critical path).
    aT = jnp.pad(lora_A.T.astype(jnp.float32),
                 ((0, r_pad - r), (0, N_pad - out_features)))
    if bias is None:
        bias_p = jnp.zeros((1, N_pad), jnp.float32)
    else:
        bias_p = jnp.pad(bias.astype(jnp.float32).reshape(1, out_features),
                         ((0, 0), (0, N_pad - out_features)))

    return dict(
        wT=wT, aT=aT, bias=bias_p,
        lora_B=lora_B.astype(jnp.float32),
        out_features=out_features, in_features=in_features,
        r=r, r_pad=r_pad, N_pad=N_pad, K_pad=K_pad, tn=tn, tk=tk,
        compute_dtype=compute_dtype,
    )


def relora_linear_apply(x, params, *, scale=1.0, tm=512):
    """Eval-mode ReLoRaLinear forward: x (..., in) -> (..., out)."""
    in_features = params["in_features"]
    out_features = params["out_features"]
    N_pad, K_pad = params["N_pad"], params["K_pad"]
    tn, tk = params["tn"], params["tk"]
    r, r_pad = params["r"], params["r_pad"]
    compute_dtype = params["compute_dtype"]

    lead_shape = x.shape[:-1]
    M = math.prod(lead_shape) if lead_shape else 1
    x2d = x.reshape(M, in_features)

    # Hoisted rank-r down-projection: tiny f32 XLA matmul (M x K x r).
    t = jnp.dot(x2d.astype(jnp.float32), params["lora_B"].T,
                preferred_element_type=jnp.float32)

    tm = min(tm, _round_up(M, 8))
    M_pad = _round_up(M, tm)

    x_p = jnp.pad(x2d, ((0, M_pad - M),
                        (0, K_pad - in_features))).astype(compute_dtype)
    t_p = jnp.pad(t, ((0, M_pad - M), (0, r_pad - r)))

    kernel = functools.partial(_relora_kernel, scale=float(scale))

    out_p = pl.pallas_call(
        kernel,
        out_shape=jax.ShapeDtypeStruct((M_pad, N_pad), x.dtype),
        grid_spec=pltpu.PrefetchScalarGridSpec(
            num_scalar_prefetch=0,
            grid=(M_pad // tm, N_pad // tn, K_pad // tk),
            in_specs=[
                pl.BlockSpec((tm, tk), lambda m, n, k: (m, k)),      # x
                pl.BlockSpec((tm, r_pad), lambda m, n, k: (m, 0)),   # t = x @ B^T
                pl.BlockSpec((tk, tn), lambda m, n, k: (k, n)),      # W^T
                pl.BlockSpec((r_pad, tn), lambda m, n, k: (0, n)),   # A^T
                pl.BlockSpec((1, tn), lambda m, n, k: (0, n)),       # bias
            ],
            out_specs=pl.BlockSpec((tm, tn), lambda m, n, k: (m, n)),
            scratch_shapes=[pltpu.VMEM((tm, tn), jnp.float32)],      # f32 accumulator
        ),
        compiler_params=pltpu.CompilerParams(
            dimension_semantics=("parallel", "parallel", "arbitrary"),
            vmem_limit_bytes=32 * 1024 * 1024),
    )(x_p, t_p, params["wT"], params["aT"], params["bias"])

    out2d = out_p[:M, :out_features]
    return out2d.reshape(*lead_shape, out_features)


def relora_linear_forward(x, weight, lora_A, lora_B, bias=None, *, scale=1.0,
                          tm=512, tn=512, tk=1024,
                          compute_dtype=jnp.bfloat16):
    """One-shot convenience wrapper (prepares weights every call)."""
    params = prepare_relora_params(weight, lora_A, lora_B, bias,
                                   tn=tn, tk=tk, compute_dtype=compute_dtype)
    return relora_linear_apply(x, params, scale=scale, tm=tm)


def _reference(x, weight, lora_A, lora_B, bias, scale):
    base = jnp.einsum("...k,nk->...n", x, weight) + bias
    lora = jnp.einsum("...r,nr->...n",
                      jnp.einsum("...k,rk->...r", x, lora_B), lora_A)
    return base - scale * lora


def _make_inputs(key, batch, seq, in_features, out_features, r):
    kx, kw, ka, kb, kbias = jax.random.split(key, 5)
    # Deterministic synthetic parameters (PyTorch zero-inits LoRA factors and
    # loads W from a checkpoint; use nonzero values so all paths are exercised).
    x = jax.random.normal(kx, (batch, seq, in_features), dtype=jnp.float32)
    weight = jax.random.normal(kw, (out_features, in_features), dtype=jnp.float32) * 0.05
    lora_A = jax.random.normal(ka, (out_features, r), dtype=jnp.float32) * 0.05
    lora_B = jax.random.normal(kb, (r, in_features), dtype=jnp.float32) * 0.05
    bias = jax.random.normal(kbias, (out_features,), dtype=jnp.float32) * 0.01
    return x, weight, lora_A, lora_B, bias


if __name__ == "__main__":
    key = jax.random.PRNGKey(0)
    k1, k2 = jax.random.split(key)

    # --- Test 1: small single-tile grid, f32 streaming (tight tolerance) -----
    x, weight, lora_A, lora_B, bias = _make_inputs(
        k1, batch=2, seq=8, in_features=32, out_features=64, r=8)
    scale = 1.0
    params1 = prepare_relora_params(weight, lora_A, lora_B, bias,
                                    compute_dtype=jnp.float32)
    out = relora_linear_apply(x, params1, scale=scale)
    out = jax.block_until_ready(out)
    ref = _reference(x, weight, lora_A, lora_B, bias, scale)
    assert out.shape == (2, 8, 64)
    assert jnp.allclose(out, ref, atol=1e-4, rtol=1e-4), "mismatch vs reference (test 1)"

    # --- Test 2: multi-tile grid (forced small tiles -> grid (3, 3, 2)), -----
    # --- bf16 streaming of x / W^T, padding of M/N/K/r, hoisted t path. ------
    x2, weight2, lora_A2, lora_B2, bias2 = _make_inputs(
        k2, batch=2, seq=24, in_features=256, out_features=384, r=8)
    scale2 = 0.5
    params2 = prepare_relora_params(weight2, lora_A2, lora_B2, bias2,
                                    tn=128, tk=128, compute_dtype=jnp.bfloat16)
    out2 = relora_linear_apply(x2, params2, scale=scale2, tm=16)
    out2 = jax.block_until_ready(out2)
    ref2 = _reference(x2, weight2, lora_A2, lora_B2, bias2, scale2)
    assert out2.shape == (2, 24, 384)
    # Looser tolerance: base path streams in bf16 (f32 accumulation).
    assert jnp.allclose(out2, ref2, atol=2e-2, rtol=2e-2), "mismatch vs reference (test 2)"

    # --- Test 3: one-shot wrapper with default (large, clamped) tiles. -------
    out3 = relora_linear_forward(x2, weight2, lora_A2, lora_B2, bias2,
                                 scale=scale2)
    out3 = jax.block_until_ready(out3)
    assert jnp.allclose(out3, ref2, atol=2e-2, rtol=2e-2), "mismatch vs reference (test 3)"

    print("KERNEL_OK")
</pallas_src>

<mosaic_0001>
module attributes {stable_mosaic.version = 11 : i64} {
  func.func @_relora_kernel(%arg0: i32, %arg1: i32, %arg2: i32, %arg3: memref<16x128xf32, #tpu.memory_space<vmem>>, %arg4: memref<16x8xf32, #tpu.memory_space<vmem>>, %arg5: memref<128x128xf32, #tpu.memory_space<vmem>>, %arg6: memref<8x128xf32, #tpu.memory_space<vmem>>, %arg7: memref<1x128xf32, #tpu.memory_space<vmem>>, %arg8: memref<16x128xf32, #tpu.memory_space<vmem>>, %arg9: memref<16x128xf32, #tpu.memory_space<vmem>>) attributes {dimension_semantics = [#tpu.dimension_semantics<parallel>, #tpu.dimension_semantics<parallel>, #tpu.dimension_semantics<arbitrary>], iteration_bounds = array<i64: 1, 1, 1>, scalar_prefetch = 0 : i64, scratch_operands = 1 : i64, tpu.core_type = #tpu.core_type<tc>, window_params = [{transform_indices = @transform_0, window_bounds = array<i64: 16, 128>}, {transform_indices = @transform_1, window_bounds = array<i64: 16, 8>}, {transform_indices = @transform_2, window_bounds = array<i64: 128, 128>}, {transform_indices = @transform_3, window_bounds = array<i64: 8, 128>}, {transform_indices = @transform_4, window_bounds = array<i64: 1, 128>}, {transform_indices = @transform_5, window_bounds = array<i64: 16, 128>}]} {
    %c0_i32 = arith.constant 0 : i32
    %0 = arith.cmpi eq, %arg2, %c0_i32 : i32
    %1 = arith.extui %0 : i1 to i32
    %c0_i32_0 = arith.constant 0 : i32
    %2 = arith.cmpi ne, %1, %c0_i32_0 : i32
    scf.if %2 {
      %cst_10 = arith.constant 0.000000e+00 : f32
      %12 = vector.broadcast %cst_10 : f32 to vector<16x128xf32>
      %c0_11 = arith.constant 0 : index
      %c0_12 = arith.constant 0 : index
      %13 = vector.load %arg9[%c0_11, %c0_12] : memref<16x128xf32, #tpu.memory_space<vmem>>, vector<16x128xf32>
      tpu.vector_store %arg9[%c0_11, %c0_12], %12 {strides = array<i32>} : memref<16x128xf32, #tpu.memory_space<vmem>>, vector<16x128xf32>,
    } else {
    }
    %c0 = arith.constant 0 : index
    %c0_1 = arith.constant 0 : index
    %3 = vector.load %arg9[%c0, %c0_1] : memref<16x128xf32, #tpu.memory_space<vmem>>, vector<16x128xf32>
    %c0_2 = arith.constant 0 : index
    %c0_3 = arith.constant 0 : index
    %4 = vector.load %arg3[%c0_2, %c0_3] : memref<16x128xf32, #tpu.memory_space<vmem>>, vector<16x128xf32>
    %c0_4 = arith.constant 0 : index
    %c0_5 = arith.constant 0 : index
    %5 = vector.load %arg5[%c0_4, %c0_5] : memref<128x128xf32, #tpu.memory_space<vmem>>, vector<128x128xf32>
    %cst = arith.constant dense<0.000000e+00> : vector<16x128xf32>
    %6 = tpu.matmul %4, %5, %cst {dimension_numbers = #tpu.dot_dimension_numbers<[1], [0], [0], [1], [0, 0, 1, 1], [], []>} : vector<16x128xf32>, vector<128x128xf32>, vector<16x128xf32> -> vector<16x128xf32>
    %7 = arith.addf %3, %6 : vector<16x128xf32>
    %c0_6 = arith.constant 0 : index
    %c0_7 = arith.constant 0 : index
    %8 = vector.load %arg9[%c0_6, %c0_7] : memref<16x128xf32, #tpu.memory_space<vmem>>, vector<16x128xf32>
    tpu.vector_store %arg9[%c0_6, %c0_7], %7 {strides = array<i32>} : memref<16x128xf32, #tpu.memory_space<vmem>>, vector<16x128xf32>,
    %c0_i32_8 = arith.constant 0 : i32
    %9 = arith.cmpi eq, %arg2, %c0_i32_8 : i32
    %10 = arith.extui %9 : i1 to i32
    %c0_i32_9 = arith.constant 0 : i32
    %11 = arith.cmpi ne, %10, %c0_i32_9 : i32
    scf.if %11 {
      %c0_10 = arith.constant 0 : index
      %c0_11 = arith.constant 0 : index
      %12 = vector.load %arg4[%c0_10, %c0_11] : memref<16x8xf32, #tpu.memory_space<vmem>>, vector<16x8xf32>
      %c0_12 = arith.constant 0 : index
      %c0_13 = arith.constant 0 : index
      %13 = vector.load %arg6[%c0_12, %c0_13] : memref<8x128xf32, #tpu.memory_space<vmem>>, vector<8x128xf32>
      %cst_14 = arith.constant dense<0.000000e+00> : vector<16x128xf32>
      %14 = tpu.matmul %12, %13, %cst_14 {dimension_numbers = #tpu.dot_dimension_numbers<[1], [0], [0], [1], [0, 0, 1, 1], [], []>} : vector<16x8xf32>, vector<8x128xf32>, vector<16x128xf32> -> vector<16x128xf32>
      %c0_15 = arith.constant 0 : index
      %c0_16 = arith.constant 0 : index
      %15 = vector.load %arg9[%c0_15, %c0_16] : memref<16x128xf32, #tpu.memory_space<vmem>>, vector<16x128xf32>
      %c0_17 = arith.constant 0 : index
      %c0_18 = arith.constant 0 : index
      %16 = vector.load %arg7[%c0_17, %c0_18] : memref<1x128xf32, #tpu.memory_space<vmem>>, vector<1x128xf32>
      %17 = vector.broadcast %16 : vector<1x128xf32> to vector<16x128xf32>
      %18 = arith.addf %15, %17 : vector<16x128xf32>
      %cst_19 = arith.constant 1.000000e+00 : f32
      %19 = vector.broadcast %cst_19 : f32 to vector<16x128xf32>
      %20 = arith.mulf %19, %14 : vector<16x128xf32>
      %21 = arith.subf %18, %20 : vector<16x128xf32>
      %c0_20 = arith.constant 0 : index
      %c0_21 = arith.constant 0 : index
      %22 = vector.load %arg8[%c0_20, %c0_21] : memref<16x128xf32, #tpu.memory_space<vmem>>, vector<16x128xf32>
      tpu.vector_store %arg8[%c0_20, %c0_21], %21 {strides = array<i32>} : memref<16x128xf32, #tpu.memory_space<vmem>>, vector<16x128xf32>,
    } else {
    }
    return
  }
  func.func @transform_0(%arg0: i32, %arg1: i32, %arg2: i32) -> (i32, i32) {
    %c0_i32 = arith.constant 0 : i32
    return %arg0, %arg2 : i32, i32
  }
  func.func @transform_1(%arg0: i32, %arg1: i32, %arg2: i32) -> (i32, i32) {
    %c0_i32 = arith.constant 0 : i32
    %c0_i32_0 = arith.constant 0 : i32
    return %arg0, %c0_i32 : i32, i32
  }
  func.func @transform_2(%arg0: i32, %arg1: i32, %arg2: i32) -> (i32, i32) {
    %c0_i32 = arith.constant 0 : i32
    return %arg2, %arg1 : i32, i32
  }
  func.func @transform_3(%arg0: i32, %arg1: i32, %arg2: i32) -> (i32, i32) {
    %c0_i32 = arith.constant 0 : i32
    %c0_i32_0 = arith.constant 0 : i32
    return %c0_i32, %arg1 : i32, i32
  }
  func.func @transform_4(%arg0: i32, %arg1: i32, %arg2: i32) -> (i32, i32) {
    %c0_i32 = arith.constant 0 : i32
    %c0_i32_0 = arith.constant 0 : i32
    return %c0_i32, %arg1 : i32, i32
  }
  func.func @transform_5(%arg0: i32, %arg1: i32, %arg2: i32) -> (i32, i32) {
    %c0_i32 = arith.constant 0 : i32
    return %arg0, %arg1 : i32, i32
  }
}

</mosaic_0001>

<llo_original>
// kernel: tpu_custom_call.1
$region0: #{tpu_custom_call.1}
  #allocation0 [shape = 'u32[]', space=smem, size = 0x4, offset = 0x4, fixed_abs, tag = 'smem constant byte address 0x4 - core index']
  #allocation1 [shape = 'u32[144,128]{1,0:T(1,128)}', space=vmem, size = 0x12000, scoped, tag = 'internal scratch']
  #allocation2 [shape = 'f32[16,128]{1,0:T(8,128)}', space=vmem, size = 0x2000, scoped, tag = 'scratch operand']
  %s0 = inlined_call_operand.vmem [shape: f32[16,128], index: 0, kind: input, shape index: {}]
  %s1 = inlined_call_operand.vmem [shape: f32[16,8], index: 1, kind: input, shape index: {}]
  %s2 = inlined_call_operand.hbm [shape: f32[128,128], index: 2, kind: input, shape index: {}]
  %s3 = inlined_call_operand.vmem [shape: f32[8,128], index: 3, kind: input, shape index: {}]
  %s4 = inlined_call_operand.vmem [shape: f32[1,128], index: 4, kind: input, shape index: {}]
  %s5 = inlined_call_operand.hbm [shape: f32[16,128], index: 5, kind: output, shape index: {}]
  %s6 = sld [smem:[#allocation0]]
  $region42: #{tpu_custom_call.1} parent=0
    _
  %s8 = ssub.s32 1, %s6
  %s9 = scalar_select 0, %s8, %s6
  $region1: #{tpu_custom_call.1} parent=0
    #allocation3 [shape = 'u8[65536]{0}', space=vmem, size = 0x10000, scoped, tag = 'input window, operand 2, single buffered']
    #allocation4 [shape = 's32[1]{0}', space=sflag, size = 0x4, scoped, tag = 'scoped memory for tpu_custom_call.1']
    #allocation5 [shape = 's32[1]{0}', space=sflag, size = 0x4, scoped, tag = 'scoped memory for tpu_custom_call.1']
    #allocation6 [shape = 'u8[8192]{0}', space=vmem, size = 0x2000, scoped, tag = 'output window, operand 0, single buffered']
    %10 = vsyncpa [#allocation4], 0
    %11 = vsyncpa [#allocation5], 0
    // Predicated region
    $region2: #{tpu_custom_call.1} parent=1 // pred_check
      _
    $region3: #{tpu_custom_call.1} parent=1 // pred_check_branch
      %13 = sbr.rel (0) target = $region5
    $region4: #{tpu_custom_call.1} parent=1 // pred_region
      _
    $region5: #{tpu_custom_call.1} parent=1 // pred_fallthru
      _
    // Predicated region
    $region6: #{tpu_custom_call.1} parent=1 // pred_check
      _
    $region7: #{tpu_custom_call.1} parent=1 // pred_check_branch
      %15 = sbr.rel (0) target = $region9
    $region8: #{tpu_custom_call.1} parent=1 // pred_region
      _
    $region9: #{tpu_custom_call.1} parent=1 // pred_fallthru
      _
    // Predicated region
    $region10: #{tpu_custom_call.1} parent=1 // pred_check
      _
    $region11: #{tpu_custom_call.1} parent=1 // pred_check_branch
      %17 = sbr.rel (0) target = $region13
    $region12: #{tpu_custom_call.1} parent=1 // pred_region
      %s19 = ssub.s32 2048, 2048
      %20 = vsyncadd [#allocation4], %s19
      %s21 = sshll.u32 [#allocation3], 4
      %s22 = int_to_ptr.vmem [resolvable:$true] %s21
      %27 = dma.hbm_to_vmem [thread:$0]  %s2, 2048, %s22, [#allocation4], 128, 128, 8
    $region13: #{tpu_custom_call.1} parent=1 // pred_fallthru
      _
    // Predicated region
    $region14: #{tpu_custom_call.1} parent=1 // pred_check
      _
    $region15: #{tpu_custom_call.1} parent=1 // pred_check_branch
      %29 = sbr.rel (0) target = $region17
    $region16: #{tpu_custom_call.1} parent=1 // pred_region
      _
    $region17: #{tpu_custom_call.1} parent=1 // pred_fallthru
      _
    // Predicated region
    $region18: #{tpu_custom_call.1} parent=1 // pred_check
      _
    $region19: #{tpu_custom_call.1} parent=1 // pred_check_branch
      %31 = sbr.rel (0) target = $region21
    $region20: #{tpu_custom_call.1} parent=1 // pred_region
      _
    $region21: #{tpu_custom_call.1} parent=1 // pred_fallthru
      _
    // Predicated region
    $region22: #{tpu_custom_call.1} parent=1 // pred_check
      _
    $region23: #{tpu_custom_call.1} parent=1 // pred_check_branch
      %33 = sbr.rel (0) target = $region25
    $region24: #{tpu_custom_call.1} parent=1 // pred_region
      %34 = dma.done [#allocation4], 2048
    $region25: #{tpu_custom_call.1} parent=1 // pred_fallthru
      _
    %p35 = scmp.eq.s32.totalorder 0, 0
    // Predicated region
    $region26: #{tpu_custom_call.1} parent=1 // pred_check
      %p36 = pneg %p35
    $region27: #{tpu_custom_call.1} parent=1 // pred_check_branch
      %38 = sbr.rel (%p36) target = $region29
    $region28: #{tpu_custom_call.1} parent=1 // pred_region
      %39 = vst [vmem:[#allocation2] sm:$0xff] 0.0
      %40 = vst [vmem:[#allocation2 + $0x8] sm:$0xff] 0.0
    $region29: #{tpu_custom_call.1} parent=1 // pred_fallthru
      _
    %v41 = vld [vmem:[#allocation2] sm:$0xff]
    %v42 = vld [vmem:[#allocation2 + $0x8] sm:$0xff]
    %v43 = vld [vmem:[%s0] sm:$0xff]
    %v44 = vld [vmem:[%s0 + $0x8] sm:$0xff]
    %v45 = vld [vmem:[#allocation3] sm:$0xff]
    %v46 = vld [vmem:[#allocation3 + $0x8] sm:$0xff]
    %v47 = vld [vmem:[#allocation3 + $0x10] sm:$0xff]
    %v48 = vld [vmem:[#allocation3 + $0x18] sm:$0xff]
    %v49 = vld [vmem:[#allocation3 + $0x20] sm:$0xff]
    %v50 = vld [vmem:[#allocation3 + $0x28] sm:$0xff]
    %v51 = vld [vmem:[#allocation3 + $0x30] sm:$0xff]
    %v52 = vld [vmem:[#allocation3 + $0x38] sm:$0xff]
    %v53 = vld [vmem:[#allocation3 + $0x40] sm:$0xff]
    %v54 = vld [vmem:[#allocation3 + $0x48] sm:$0xff]
    %v55 = vld [vmem:[#allocation3 + $0x50] sm:$0xff]
    %v56 = vld [vmem:[#allocation3 + $0x58] sm:$0xff]
    %v57 = vld [vmem:[#allocation3 + $0x60] sm:$0xff]
    %v58 = vld [vmem:[#allocation3 + $0x68] sm:$0xff]
    %v59 = vld [vmem:[#allocation3 + $0x70] sm:$0xff]
    %v60 = vld [vmem:[#allocation3 + $0x78] sm:$0xff]
    %61 = vmatprep.subr.mxu0 0.0
    %62 = vmatpush1.msra.mxu0 %v45
    %63 = vmatprep.subr.mxu0 0.0
    %64 = vmatpush1.msra.mxu0 %v46
    %65 = vmatprep.subr.mxu0 0.0
    %66 = vmatpush1.msra.mxu0 %v47
    %67 = vmatprep.subr.mxu0 0.0
    %68 = vmatpush1.msra.mxu0 %v48
    %69 = vmatprep.subr.mxu0 0.0
    %70 = vmatpush1.msra.mxu0 %v49
    %71 = vmatprep.subr.mxu0 0.0
    %72 = vmatpush1.msra.mxu0 %v50
    %73 = vmatprep.subr.mxu0 0.0
    %74 = vmatpush1.msra.mxu0 %v51
    %75 = vmatprep.subr.mxu0 0.0
    %76 = vmatpush1.msra.mxu0 %v52
    %77 = vmatprep.subr.mxu0 0.0
    %78 = vmatpush1.msra.mxu0 %v53
    %79 = vmatprep.subr.mxu0 0.0
    %80 = vmatpush1.msra.mxu0 %v54
    %81 = vmatprep.subr.mxu0 0.0
    %82 = vmatpush1.msra.mxu0 %v55
    %83 = vmatprep.subr.mxu0 0.0
    %84 = vmatpush1.msra.mxu0 %v56
    %85 = vmatprep.subr.mxu0 0.0
    %86 = vmatpush1.msra.mxu0 %v57
    %87 = vmatprep.subr.mxu0 0.0
    %88 = vmatpush1.msra.mxu0 %v58
    %89 = vmatprep.subr.mxu0 0.0
    %90 = vmatpush1.msra.mxu0 %v59
    %91 = vmatprep.subr.mxu0 0.0
    %92 = vmatpush1.msra.mxu0 %v60
    %93 = vmatprep.subr.mxu0 0.0
    %94 = vmatpush1.msra.mxu0 0.0
    %95 = vmatprep.subr.mxu0 0.0
    %96 = vmatpush1.msra.mxu0 0.0
    %97 = vmatprep.subr.mxu0 0.0
    %98 = vmatpush1.msra.mxu0 0.0
    %99 = vmatprep.subr.mxu0 0.0
    %100 = vmatpush1.msra.mxu0 0.0
    %101 = vmatprep.subr.mxu0 0.0
    %102 = vmatpush1.msra.mxu0 0.0
    %103 = vmatprep.subr.mxu0 0.0
    %104 = vmatpush1.msra.mxu0 0.0
    %105 = vmatprep.subr.mxu0 0.0
    %106 = vmatpush1.msra.mxu0 0.0
    %107 = vmatprep.subr.mxu0 0.0
    %108 = vmatpush1.msra.mxu0 0.0
    %109 = vmatprep.subr.mxu0 0.0
    %110 = vmatpush1.msra.mxu0 0.0
    %111 = vmatprep.subr.mxu0 0.0
    %112 = vmatpush1.msra.mxu0 0.0
    %113 = vmatprep.subr.mxu0 0.0
    %114 = vmatpush1.msra.mxu0 0.0
    %115 = vmatprep.subr.mxu0 0.0
    %116 = vmatpush1.msra.mxu0 0.0
    %117 = vmatprep.subr.mxu0 0.0
    %118 = vmatpush1.msra.mxu0 0.0
    %119 = vmatprep.subr.mxu0 0.0
    %120 = vmatpush1.msra.mxu0 0.0
    %121 = vmatprep.subr.mxu0 0.0
    %122 = vmatpush1.msra.mxu0 0.0
    %123 = vmatprep.subr.mxu0 0.0
    %124 = vmatpush1.msra.mxu0 0.0
    %125 = vmatprep.mubr.f32.mxu0 0.0
    %126 = vmatmul.mubr.f32.gmra.mrb[0].mxu0 %v43
    %v127 = vpop.f32.mrb[0].mxu0
    %v128 = vadd.f32 0.0, %v127
    %v129 = vpop.f32.mrb[0].mxu0
    %130 = vmatprep.mubr.f32.mxu0 0.0
    %131 = vmatmul.mubr.f32.gmra.mrb[0].mxu0 %v44
    %v132 = vpop.f32.mrb[0].mxu0
    %v133 = vadd.f32 0.0, %v132
    %v134 = vpop.f32.mrb[0].mxu0
    %135 = vdwg.mxu0
    %v136 = vadd.f32 %v41, %v128
    %v137 = vadd.f32 %v42, %v133
    %138 = vst [vmem:[#allocation2] sm:$0xff] %v136
    %139 = vst [vmem:[#allocation2 + $0x8] sm:$0xff] %v137
    // Predicated region
    $region30: #{tpu_custom_call.1} parent=1 // pred_check
      %p140 = pneg %p35
    $region31: #{tpu_custom_call.1} parent=1 // pred_check_branch
      %142 = sbr.rel (%p140) target = $region33
    $region32: #{tpu_custom_call.1} parent=1 // pred_region
      %v143 = vld [vmem:[%s1] sm:$0xff]
      %v144 = vld [vmem:[%s1 + $0x8] sm:$0xff]
      %v145 = vld [vmem:[%s3] sm:$0xff]
      %vm146 = vcmask 64512
      %v148 = vsel %vm146, %v143, 0
      %v151 = vsel %vm146, %v144, 0
      %153 = vmatprep.subr.mxu0 0.0
      %154 = vmatpush1.msra.mxu0 %v145
      %155 = vmatprep.subr.mxu0 0.0
      %156 = vmatpush1.msra.mxu0 0.0
      %157 = vmatprep.subr.mxu0 0.0
      %158 = vmatpush1.msra.mxu0 0.0
      %159 = vmatprep.subr.mxu0 0.0
      %160 = vmatpush1.msra.mxu0 0.0
      %161 = vmatprep.subr.mxu0 0.0
      %162 = vmatpush1.msra.mxu0 0.0
      %163 = vmatprep.subr.mxu0 0.0
      %164 = vmatpush1.msra.mxu0 0.0
      %165 = vmatprep.subr.mxu0 0.0
      %166 = vmatpush1.msra.mxu0 0.0
      %167 = vmatprep.subr.mxu0 0.0
      %168 = vmatpush1.msra.mxu0 0.0
      %169 = vmatprep.subr.mxu0 0.0
      %170 = vmatpush1.msra.mxu0 0.0
      %171 = vmatprep.subr.mxu0 0.0
      %172 = vmatpush1.msra.mxu0 0.0
      %173 = vmatprep.subr.mxu0 0.0
      %174 = vmatpush1.msra.mxu0 0.0
      %175 = vmatprep.subr.mxu0 0.0
      %176 = vmatpush1.msra.mxu0 0.0
      %177 = vmatprep.subr.mxu0 0.0
      %178 = vmatpush1.msra.mxu0 0.0
      %179 = vmatprep.subr.mxu0 0.0
      %180 = vmatpush1.msra.mxu0 0.0
      %181 = vmatprep.subr.mxu0 0.0
      %182 = vmatpush1.msra.mxu0 0.0
      %183 = vmatprep.subr.mxu0 0.0
      %184 = vmatpush1.msra.mxu0 0.0
      %185 = vmatprep.subr.mxu0 0.0
      %186 = vmatpush1.msra.mxu0 0.0
      %187 = vmatprep.subr.mxu0 0.0
      %188 = vmatpush1.msra.mxu0 0.0
      %189 = vmatprep.subr.mxu0 0.0
      %190 = vmatpush1.msra.mxu0 0.0
      %191 = vmatprep.subr.mxu0 0.0
      %192 = vmatpush1.msra.mxu0 0.0
      %193 = vmatprep.subr.mxu0 0.0
      %194 = vmatpush1.msra.mxu0 0.0
      %195 = vmatprep.subr.mxu0 0.0
      %196 = vmatpush1.msra.mxu0 0.0
      %197 = vmatprep.subr.mxu0 0.0
      %198 = vmatpush1.msra.mxu0 0.0
      %199 = vmatprep.subr.mxu0 0.0
      %200 = vmatpush1.msra.mxu0 0.0
      %201 = vmatprep.subr.mxu0 0.0
      %202 = vmatpush1.msra.mxu0 0.0
      %203 = vmatprep.subr.mxu0 0.0
      %204 = vmatpush1.msra.mxu0 0.0
      %205 = vmatprep.subr.mxu0 0.0
      %206 = vmatpush1.msra.mxu0 0.0
      %207 = vmatprep.subr.mxu0 0.0
      %208 = vmatpush1.msra.mxu0 0.0
      %209 = vmatprep.subr.mxu0 0.0
      %210 = vmatpush1.msra.mxu0 0.0
      %211 = vmatprep.subr.mxu0 0.0
      %212 = vmatpush1.msra.mxu0 0.0
      %213 = vmatprep.subr.mxu0 0.0
      %214 = vmatpush1.msra.mxu0 0.0
      %215 = vmatprep.subr.mxu0 0.0
      %216 = vmatpush1.msra.mxu0 0.0
      %217 = vmatprep.mubr.f32.mxu0 0.0
      %218 = vmatmul.mubr.f32.gmra.mrb[0].mxu0 %v148
      %v219 = vpop.f32.mrb[0].mxu0
      %v220 = vadd.f32 0.0, %v219
      %v221 = vpop.f32.mrb[0].mxu0
      %222 = vmatprep.mubr.f32.mxu0 0.0
      %223 = vmatmul.mubr.f32.gmra.mrb[0].mxu0 %v151
      %v224 = vpop.f32.mrb[0].mxu0
      %v225 = vadd.f32 0.0, %v224
      %v226 = vpop.f32.mrb[0].mxu0
      %227 = vdwg.mxu0
      %v228 = vld [vmem:[#allocation2] sm:$0xff]
      %v229 = vld [vmem:[#allocation2 + $0x8] sm:$0xff]
      %v230 = vld [vmem:[%s4] sm:$0x1]
      %v232 = vlaneseq
      %v233 = vshrl.u32 %v232, 7
      %v234 = vsub.s32 0, %v233
      %v235 = vrot.slane %v230, %v234
      %v237 = vadd.f32 %v228, %v235
      %v238 = vadd.f32 %v229, %v235
      %v239 = vsub.f32 %v237, %v220
      %v240 = vsub.f32 %v238, %v225
      %241 = vst [vmem:[#allocation6] sm:$0xff] %v239
      %242 = vst [vmem:[#allocation6 + $0x8] sm:$0xff] %v240
    $region33: #{tpu_custom_call.1} parent=1 // pred_fallthru
      _
    // Predicated region
    $region34: #{tpu_custom_call.1} parent=1 // pred_check
      _
    $region35: #{tpu_custom_call.1} parent=1 // pred_check_branch
      %244 = sbr.rel (0) target = $region37
    $region36: #{tpu_custom_call.1} parent=1 // pred_region
      %s246 = ssub.s32 256, 256
      %247 = vsyncadd [#allocation5], %s246
      %s248 = sshll.u32 [#allocation6], 4
      %s249 = int_to_ptr.vmem [resolvable:$true] %s248
      %254 = dma.vmem_to_hbm [thread:$0]  %s249, 256, %s5, [#allocation5], 128, 128, 8
    $region37: #{tpu_custom_call.1} parent=1 // pred_fallthru
      _
    // Predicated region
    $region38: #{tpu_custom_call.1} parent=1 // pred_check
      _
    $region39: #{tpu_custom_call.1} parent=1 // pred_check_branch
      %256 = sbr.rel (0) target = $region41
    $region40: #{tpu_custom_call.1} parent=1 // pred_region
      %257 = dma.done [#allocation5], 256
    $region41: #{tpu_custom_call.1} parent=1 // pred_fallthru
      _
    %258 = vsyncpa [#allocation4], 1
    %259 = vsyncpa [#allocation5], 1

</llo_original>
